<compile_context>
chip_gen: v5e
topology: v5e:2x2
jax: 0.10.0
libtpu: 0.0.40
codegen_flags: <defaults>
</compile_context>

<pallas_src>
import functools

import jax
import jax.numpy as jnp
from jax.experimental import pallas as pl
from jax.experimental.pallas import tpu as pltpu


def _spatial_transform_kernel(src_ref, flow_ref, out_ref, *, H, W):
    """One (batch, out-tile) grid step.

    src_ref : (1, C, H, W)  f32  full source image for this batch element
    flow_ref: (1, 2, T_OUT) f32  flow[0]=row (H) coord, flow[1]=col (W) coord
    out_ref : (1, C, T_OUT) f32
    """
    C = src_ref.shape[1]
    t_out = flow_ref.shape[-1]

    y = flow_ref[0, 0:1, :]                    # (1, T_OUT) row coordinate
    x = flow_ref[0, 1:2, :]                    # (1, T_OUT) col coordinate

    y0 = jnp.floor(y)
    x0 = jnp.floor(x)
    wy1 = y - y0
    wy0 = 1.0 - wy1
    wx1 = x - x0
    wx0 = 1.0 - wx1

    # padding_mode='zeros': fold per-corner validity into the (1, T_OUT)
    # weights.  Done in f32 BEFORE the int cast so huge / NaN coordinates
    # (whose int32 cast may wrap into range) always carry zero weight.
    wx0 = jnp.where((x0 >= 0.0) & (x0 <= W - 1.0), wx0, 0.0)
    wx1 = jnp.where((x0 >= -1.0) & (x0 <= W - 2.0), wx1, 0.0)   # x0+1 in bounds
    wy0 = jnp.where((y0 >= 0.0) & (y0 <= H - 1.0), wy0, 0.0)
    wy1 = jnp.where((y0 >= -1.0) & (y0 <= H - 2.0), wy1, 0.0)   # y0+1 in bounds

    x0i = x0.astype(jnp.int32)                 # (1, T_OUT)
    y0i = y0.astype(jnp.int32)

    # Column-interpolation matrix Bx[w, o] = weight of source column w for
    # output pixel o (x-validity folded in).  x0 and x0+1 are distinct, so the
    # two where-branches never collide.  No (t_src, t_out) diff temporary.
    iota_w = jax.lax.broadcasted_iota(jnp.int32, (W, t_out), 0)
    bx = jnp.where(iota_w == x0i, wx0, 0.0)
    bx = jnp.where(iota_w == x0i + 1, wx1, bx)

    # Row-interpolation matrix By[h, o].
    iota_h = jax.lax.broadcasted_iota(jnp.int32, (H, t_out), 0)
    by = jnp.where(iota_h == y0i, wy0, 0.0)
    by = jnp.where(iota_h == y0i + 1, wy1, by)

    # Stage 1 (MXU): column interpolation, (H, W) @ (W, T_OUT) per channel.
    # Stage 2 (VPU + XLU): row interpolation via multiply + reduce over H.
    rows = []
    for c in range(C):                         # C is small and static
        col_interp = jnp.dot(src_ref[0, c], bx,
                             preferred_element_type=jnp.float32)   # (H, T_OUT)
        rows.append(jnp.sum(col_interp * by, axis=0, keepdims=True))
    out_ref[0] = jnp.concatenate(rows, axis=0)


def _round_up(x, m):
    return ((x + m - 1) // m) * m


def spatial_transform_flow(src, flow, *, t_out_target=512):
    """src: (N, C, H, W); flow: (N, 2, H, W) -> (N, C, H, W) f32 bilinear sample."""
    N, C, H, W = src.shape
    assert flow.shape == (N, 2, H, W)
    assert H >= 2 and W >= 2              # PyTorch source divides by (shape-1)
    HW = H * W

    # Lane-dense output tiling over flattened HW; pad instead of exploding to t=HW.
    hw128 = _round_up(HW, 128)
    t_out = min(_round_up(t_out_target, 128), hw128)
    if N == 1 and hw128 // t_out < 2 and hw128 >= 256:
        # Megacore (v7x): guarantee >= 2 units of "parallel" grid work.
        t_out = max(128, (hw128 // 2 // 128) * 128)
    hw_pad = _round_up(HW, t_out)
    n_out = hw_pad // t_out

    src_f = src.astype(jnp.float32)
    flow_f = flow.reshape(N, 2, HW).astype(jnp.float32)
    if hw_pad != HW:
        # Padded coordinates are out of range -> zero weights; sliced off below.
        flow_f = jnp.pad(flow_f, ((0, 0), (0, 0), (0, hw_pad - HW)),
                         constant_values=-2.0)

    # Per-step VMEM estimate: double-buffered IO blocks + Bx/By/stage-1 temps.
    bytes_f32 = 4
    vmem_est = bytes_f32 * (2 * C * H * W + 2 * 2 * t_out + 2 * C * t_out
                            + (2 * W + 2 * H + H) * t_out)
    compiler_kwargs = dict(dimension_semantics=("parallel", "parallel"))
    if vmem_est > 12 * 1024 * 1024:
        # Only raise the scoped-VMEM limit when large images actually need it
        # (cap well under v7x's 64 MiB physical VMEM).
        compiler_kwargs["vmem_limit_bytes"] = min(int(vmem_est * 3 // 2),
                                                  56 * 1024 * 1024)

    kernel = functools.partial(_spatial_transform_kernel, H=H, W=W)
    out = pl.pallas_call(
        kernel,
        out_shape=jax.ShapeDtypeStruct((N, C, hw_pad), jnp.float32),
        grid=(N, n_out),
        in_specs=[
            pl.BlockSpec((1, C, H, W), lambda n, o: (n, 0, 0, 0)),
            pl.BlockSpec((1, 2, t_out), lambda n, o: (n, 0, o)),
        ],
        out_specs=pl.BlockSpec((1, C, t_out), lambda n, o: (n, 0, o)),
        compiler_params=pltpu.CompilerParams(**compiler_kwargs),
    )(src_f, flow_f)
    return out[:, :, :HW].reshape(N, C, H, W)


def _reference_grid_sample(src, flow):
    """Pure-JAX reference mirroring the PyTorch forward (bilinear,
    align_corners=True, padding_mode='zeros'), including the explicit
    normalize/un-normalize round trip."""
    N, C, H, W = src.shape
    fy, fx = flow[:, 0], flow[:, 1]                     # (N, H, W)
    ny = 2.0 * (fy / (H - 1.0) - 0.5)
    nx = 2.0 * (fx / (W - 1.0) - 0.5)
    y = (ny + 1.0) * 0.5 * (H - 1.0)
    x = (nx + 1.0) * 0.5 * (W - 1.0)
    x0 = jnp.floor(x)
    y0 = jnp.floor(y)
    wx1 = x - x0
    wx0 = 1.0 - wx1
    wy1 = y - y0
    wy0 = 1.0 - wy1

    def corner(yc, xc):
        valid = (xc >= 0) & (xc <= W - 1) & (yc >= 0) & (yc <= H - 1)
        xi = jnp.clip(xc, 0, W - 1).astype(jnp.int32)
        yi = jnp.clip(yc, 0, H - 1).astype(jnp.int32)
        g = jax.vmap(lambda im, yy, xx: im[:, yy, xx])(src, yi, xi)  # (N,C,H,W)
        return jnp.where(valid[:, None], g, 0.0)

    return ((wy0 * wx0)[:, None] * corner(y0, x0)
            + (wy0 * wx1)[:, None] * corner(y0, x0 + 1.0)
            + (wy1 * wx0)[:, None] * corner(y0 + 1.0, x0)
            + (wy1 * wx1)[:, None] * corner(y0 + 1.0, x0 + 1.0))


if __name__ == "__main__":
    key = jax.random.PRNGKey(0)
    N, C, H, W = 2, 4, 16, 16

    # Identity meshgrid buffer from __init__ (mirrors the registered state).
    grid_buffer = jnp.stack(
        jnp.meshgrid(jnp.arange(H), jnp.arange(W), indexing="ij")
    )[None].astype(jnp.float32)                          # (1, 2, H, W)

    k1, k2 = jax.random.split(key)
    src = jax.random.normal(k1, (N, C, H, W), dtype=jnp.float32)
    # flow = identity coordinates + displacement (absolute pixel locations, as
    # this "_flow" variant expects); some samples fall out of bounds on purpose.
    disp = 2.0 * jax.random.normal(k2, (N, 2, H, W), dtype=jnp.float32)
    flow = jnp.broadcast_to(grid_buffer, (N, 2, H, W)) + disp

    out = spatial_transform_flow(src, flow)
    out = jax.block_until_ready(out)

    ref = _reference_grid_sample(src, flow)
    assert out.shape == (N, C, H, W)
    assert jnp.allclose(out, ref, atol=1e-3, rtol=1e-3)

    # Robustness check (review concern): NaN / huge coordinates must produce
    # exactly-zero, finite output (validity masked in f32 before the int cast).
    flow_bad = flow.at[0, :, 0, 0].set(jnp.nan).at[1, :, 3, 5].set(1e9)
    out_bad = jax.block_until_ready(spatial_transform_flow(src, flow_bad))
    assert bool(jnp.isfinite(out_bad).all())
    assert bool(jnp.all(out_bad[0, :, 0, 0] == 0.0))
    assert bool(jnp.all(out_bad[1, :, 3, 5] == 0.0))

    print("KERNEL_OK")
</pallas_src>

<mosaic_0001>
module attributes {stable_mosaic.version = 11 : i64} {
  func.func @_spatial_transform_kernel(%arg0: i32, %arg1: i32, %arg2: memref<1x4x16x16xf32, #tpu.memory_space<vmem>>, %arg3: memref<1x2x256xf32, #tpu.memory_space<vmem>>, %arg4: memref<1x4x256xf32, #tpu.memory_space<vmem>>) attributes {dimension_semantics = [#tpu.dimension_semantics<parallel>, #tpu.dimension_semantics<parallel>], iteration_bounds = array<i64: 2, 1>, scalar_prefetch = 0 : i64, scratch_operands = 0 : i64, tpu.core_type = #tpu.core_type<tc>, window_params = [{transform_indices = @transform_0, window_bounds = array<i64: 1, 4, 16, 16>}, {transform_indices = @transform_1, window_bounds = array<i64: 1, 2, 256>}, {transform_indices = @transform_2, window_bounds = array<i64: 1, 4, 256>}]} {
    %c0 = arith.constant 0 : index
    %c0_0 = arith.constant 0 : index
    %c0_1 = arith.constant 0 : index
    %0 = vector.load %arg3[%c0, %c0_0, %c0_1] : memref<1x2x256xf32, #tpu.memory_space<vmem>>, vector<1x1x256xf32>
    %1 = vector.shape_cast %0 : vector<1x1x256xf32> to vector<1x256xf32>
    %c0_2 = arith.constant 0 : index
    %c1 = arith.constant 1 : index
    %c0_3 = arith.constant 0 : index
    %2 = vector.load %arg3[%c0_2, %c1, %c0_3] : memref<1x2x256xf32, #tpu.memory_space<vmem>>, vector<1x1x256xf32>
    %3 = vector.shape_cast %2 : vector<1x1x256xf32> to vector<1x256xf32>
    %4 = math.floor %1 : vector<1x256xf32>
    %5 = math.floor %3 : vector<1x256xf32>
    %6 = arith.subf %1, %4 : vector<1x256xf32>
    %cst = arith.constant 1.000000e+00 : f32
    %7 = vector.broadcast %cst : f32 to vector<1x256xf32>
    %8 = arith.subf %7, %6 : vector<1x256xf32>
    %9 = arith.subf %3, %5 : vector<1x256xf32>
    %cst_4 = arith.constant 1.000000e+00 : f32
    %10 = vector.broadcast %cst_4 : f32 to vector<1x256xf32>
    %11 = arith.subf %10, %9 : vector<1x256xf32>
    %cst_5 = arith.constant 0.000000e+00 : f32
    %12 = vector.broadcast %cst_5 : f32 to vector<1x256xf32>
    %13 = arith.cmpf oge, %5, %12 : vector<1x256xf32>
    %cst_6 = arith.constant 1.500000e+01 : f32
    %14 = vector.broadcast %cst_6 : f32 to vector<1x256xf32>
    %15 = arith.cmpf ole, %5, %14 : vector<1x256xf32>
    %16 = arith.andi %13, %15 : vector<1x256xi1>
    %cst_7 = arith.constant 0.000000e+00 : f32
    %17 = vector.broadcast %cst_7 : f32 to vector<1x256xf32>
    %18 = arith.select %16, %11, %17 : vector<1x256xi1>, vector<1x256xf32>
    %cst_8 = arith.constant -1.000000e+00 : f32
    %19 = vector.broadcast %cst_8 : f32 to vector<1x256xf32>
    %20 = arith.cmpf oge, %5, %19 : vector<1x256xf32>
    %cst_9 = arith.constant 1.400000e+01 : f32
    %21 = vector.broadcast %cst_9 : f32 to vector<1x256xf32>
    %22 = arith.cmpf ole, %5, %21 : vector<1x256xf32>
    %23 = arith.andi %20, %22 : vector<1x256xi1>
    %cst_10 = arith.constant 0.000000e+00 : f32
    %24 = vector.broadcast %cst_10 : f32 to vector<1x256xf32>
    %25 = arith.select %23, %9, %24 : vector<1x256xi1>, vector<1x256xf32>
    %cst_11 = arith.constant 0.000000e+00 : f32
    %26 = vector.broadcast %cst_11 : f32 to vector<1x256xf32>
    %27 = arith.cmpf oge, %4, %26 : vector<1x256xf32>
    %cst_12 = arith.constant 1.500000e+01 : f32
    %28 = vector.broadcast %cst_12 : f32 to vector<1x256xf32>
    %29 = arith.cmpf ole, %4, %28 : vector<1x256xf32>
    %30 = arith.andi %27, %29 : vector<1x256xi1>
    %cst_13 = arith.constant 0.000000e+00 : f32
    %31 = vector.broadcast %cst_13 : f32 to vector<1x256xf32>
    %32 = arith.select %30, %8, %31 : vector<1x256xi1>, vector<1x256xf32>
    %cst_14 = arith.constant -1.000000e+00 : f32
    %33 = vector.broadcast %cst_14 : f32 to vector<1x256xf32>
    %34 = arith.cmpf oge, %4, %33 : vector<1x256xf32>
    %cst_15 = arith.constant 1.400000e+01 : f32
    %35 = vector.broadcast %cst_15 : f32 to vector<1x256xf32>
    %36 = arith.cmpf ole, %4, %35 : vector<1x256xf32>
    %37 = arith.andi %34, %36 : vector<1x256xi1>
    %cst_16 = arith.constant 0.000000e+00 : f32
    %38 = vector.broadcast %cst_16 : f32 to vector<1x256xf32>
    %39 = arith.select %37, %6, %38 : vector<1x256xi1>, vector<1x256xf32>
    %40 = arith.fptosi %5 : vector<1x256xf32> to vector<1x256xi32>
    %41 = arith.fptosi %4 : vector<1x256xf32> to vector<1x256xi32>
    %42 = tpu.iota {dimensions = array<i32: 0>} : vector<16x256xi32>
    %43 = vector.broadcast %40 : vector<1x256xi32> to vector<16x256xi32>
    %44 = arith.cmpi eq, %42, %43 : vector<16x256xi32>
    %cst_17 = arith.constant 0.000000e+00 : f32
    %45 = vector.shape_cast %18 : vector<1x256xf32> to vector<1x256xf32>
    %46 = vector.broadcast %45 : vector<1x256xf32> to vector<16x256xf32>
    %47 = vector.broadcast %cst_17 : f32 to vector<16x256xf32>
    %48 = arith.select %44, %46, %47 : vector<16x256xi1>, vector<16x256xf32>
    %c1_i32 = arith.constant 1 : i32
    %49 = vector.broadcast %c1_i32 : i32 to vector<1x256xi32>
    %50 = arith.addi %40, %49 : vector<1x256xi32>
    %51 = vector.broadcast %50 : vector<1x256xi32> to vector<16x256xi32>
    %52 = arith.cmpi eq, %42, %51 : vector<16x256xi32>
    %53 = vector.shape_cast %25 : vector<1x256xf32> to vector<1x256xf32>
    %54 = vector.broadcast %53 : vector<1x256xf32> to vector<16x256xf32>
    %55 = arith.select %52, %54, %48 : vector<16x256xi1>, vector<16x256xf32>
    %56 = tpu.iota {dimensions = array<i32: 0>} : vector<16x256xi32>
    %57 = vector.broadcast %41 : vector<1x256xi32> to vector<16x256xi32>
    %58 = arith.cmpi eq, %56, %57 : vector<16x256xi32>
    %cst_18 = arith.constant 0.000000e+00 : f32
    %59 = vector.shape_cast %32 : vector<1x256xf32> to vector<1x256xf32>
    %60 = vector.broadcast %59 : vector<1x256xf32> to vector<16x256xf32>
    %61 = vector.broadcast %cst_18 : f32 to vector<16x256xf32>
    %62 = arith.select %58, %60, %61 : vector<16x256xi1>, vector<16x256xf32>
    %c1_i32_19 = arith.constant 1 : i32
    %63 = vector.broadcast %c1_i32_19 : i32 to vector<1x256xi32>
    %64 = arith.addi %41, %63 : vector<1x256xi32>
    %65 = vector.broadcast %64 : vector<1x256xi32> to vector<16x256xi32>
    %66 = arith.cmpi eq, %56, %65 : vector<16x256xi32>
    %67 = vector.shape_cast %39 : vector<1x256xf32> to vector<1x256xf32>
    %68 = vector.broadcast %67 : vector<1x256xf32> to vector<16x256xf32>
    %69 = arith.select %66, %68, %62 : vector<16x256xi1>, vector<16x256xf32>
    %c0_20 = arith.constant 0 : index
    %c0_21 = arith.constant 0 : index
    %c0_22 = arith.constant 0 : index
    %c0_23 = arith.constant 0 : index
    %70 = vector.load %arg2[%c0_20, %c0_21, %c0_22, %c0_23] : memref<1x4x16x16xf32, #tpu.memory_space<vmem>>, vector<1x1x16x16xf32>
    %71 = vector.shape_cast %70 : vector<1x1x16x16xf32> to vector<16x16xf32>
    %cst_24 = arith.constant dense<0.000000e+00> : vector<16x256xf32>
    %72 = tpu.matmul %71, %55, %cst_24 {dimension_numbers = #tpu.dot_dimension_numbers<[1], [0], [0], [1], [0, 0, 1, 1], [], []>} : vector<16x16xf32>, vector<16x256xf32>, vector<16x256xf32> -> vector<16x256xf32>
    %73 = arith.mulf %72, %69 : vector<16x256xf32>
    %cst_25 = arith.constant dense<0.000000e+00> : vector<256xf32>
    %74 = vector.multi_reduction <add>, %73, %cst_25 [0] : vector<16x256xf32> to vector<256xf32>
    %75 = vector.shape_cast %74 : vector<256xf32> to vector<1x256xf32>
    %c0_26 = arith.constant 0 : index
    %c1_27 = arith.constant 1 : index
    %c0_28 = arith.constant 0 : index
    %c0_29 = arith.constant 0 : index
    %76 = vector.load %arg2[%c0_26, %c1_27, %c0_28, %c0_29] : memref<1x4x16x16xf32, #tpu.memory_space<vmem>>, vector<1x1x16x16xf32>
    %77 = vector.shape_cast %76 : vector<1x1x16x16xf32> to vector<16x16xf32>
    %cst_30 = arith.constant dense<0.000000e+00> : vector<16x256xf32>
    %78 = tpu.matmul %77, %55, %cst_30 {dimension_numbers = #tpu.dot_dimension_numbers<[1], [0], [0], [1], [0, 0, 1, 1], [], []>} : vector<16x16xf32>, vector<16x256xf32>, vector<16x256xf32> -> vector<16x256xf32>
    %79 = arith.mulf %78, %69 : vector<16x256xf32>
    %cst_31 = arith.constant dense<0.000000e+00> : vector<256xf32>
    %80 = vector.multi_reduction <add>, %79, %cst_31 [0] : vector<16x256xf32> to vector<256xf32>
    %81 = vector.shape_cast %80 : vector<256xf32> to vector<1x256xf32>
    %c0_32 = arith.constant 0 : index
    %c2 = arith.constant 2 : index
    %c0_33 = arith.constant 0 : index
    %c0_34 = arith.constant 0 : index
    %82 = vector.load %arg2[%c0_32, %c2, %c0_33, %c0_34] : memref<1x4x16x16xf32, #tpu.memory_space<vmem>>, vector<1x1x16x16xf32>
    %83 = vector.shape_cast %82 : vector<1x1x16x16xf32> to vector<16x16xf32>
    %cst_35 = arith.constant dense<0.000000e+00> : vector<16x256xf32>
    %84 = tpu.matmul %83, %55, %cst_35 {dimension_numbers = #tpu.dot_dimension_numbers<[1], [0], [0], [1], [0, 0, 1, 1], [], []>} : vector<16x16xf32>, vector<16x256xf32>, vector<16x256xf32> -> vector<16x256xf32>
    %85 = arith.mulf %84, %69 : vector<16x256xf32>
    %cst_36 = arith.constant dense<0.000000e+00> : vector<256xf32>
    %86 = vector.multi_reduction <add>, %85, %cst_36 [0] : vector<16x256xf32> to vector<256xf32>
    %87 = vector.shape_cast %86 : vector<256xf32> to vector<1x256xf32>
    %c0_37 = arith.constant 0 : index
    %c3 = arith.constant 3 : index
    %c0_38 = arith.constant 0 : index
    %c0_39 = arith.constant 0 : index
    %88 = vector.load %arg2[%c0_37, %c3, %c0_38, %c0_39] : memref<1x4x16x16xf32, #tpu.memory_space<vmem>>, vector<1x1x16x16xf32>
    %89 = vector.shape_cast %88 : vector<1x1x16x16xf32> to vector<16x16xf32>
    %cst_40 = arith.constant dense<0.000000e+00> : vector<16x256xf32>
    %90 = tpu.matmul %89, %55, %cst_40 {dimension_numbers = #tpu.dot_dimension_numbers<[1], [0], [0], [1], [0, 0, 1, 1], [], []>} : vector<16x16xf32>, vector<16x256xf32>, vector<16x256xf32> -> vector<16x256xf32>
    %91 = arith.mulf %90, %69 : vector<16x256xf32>
    %cst_41 = arith.constant dense<0.000000e+00> : vector<256xf32>
    %92 = vector.multi_reduction <add>, %91, %cst_41 [0] : vector<16x256xf32> to vector<256xf32>
    %93 = vector.shape_cast %92 : vector<256xf32> to vector<1x256xf32>
    %94 = tpu.concatenate %75, %81, %87, %93 in 0 : vector<1x256xf32>, vector<1x256xf32>, vector<1x256xf32>, vector<1x256xf32> -> vector<4x256xf32>
    %c0_42 = arith.constant 0 : index
    %c0_43 = arith.constant 0 : index
    %c0_44 = arith.constant 0 : index
    %95 = vector.load %arg4[%c0_42, %c0_43, %c0_44] : memref<1x4x256xf32, #tpu.memory_space<vmem>>, vector<1x4x256xf32>
    %96 = vector.shape_cast %95 : vector<1x4x256xf32> to vector<4x256xf32>
    %97 = vector.shape_cast %94 : vector<4x256xf32> to vector<1x4x256xf32>
    tpu.vector_store %arg4[%c0_42, %c0_43, %c0_44], %97 {strides = array<i32>} : memref<1x4x256xf32, #tpu.memory_space<vmem>>, vector<1x4x256xf32>,
    return
  }
  func.func @transform_0(%arg0: i32, %arg1: i32) -> (i32, i32, i32, i32) {
    %c0_i32 = arith.constant 0 : i32
    %c0_i32_0 = arith.constant 0 : i32
    %c0_i32_1 = arith.constant 0 : i32
    %c0_i32_2 = arith.constant 0 : i32
    return %arg0, %c0_i32, %c0_i32_0, %c0_i32_1 : i32, i32, i32, i32
  }
  func.func @transform_1(%arg0: i32, %arg1: i32) -> (i32, i32, i32) {
    %c0_i32 = arith.constant 0 : i32
    %c0_i32_0 = arith.constant 0 : i32
    return %arg0, %c0_i32, %arg1 : i32, i32, i32
  }
  func.func @transform_2(%arg0: i32, %arg1: i32) -> (i32, i32, i32) {
    %c0_i32 = arith.constant 0 : i32
    %c0_i32_0 = arith.constant 0 : i32
    return %arg0, %c0_i32, %arg1 : i32, i32, i32
  }
}

</mosaic_0001>

<llo_original>
// kernel: tpu_custom_call.1
$region0: #{tpu_custom_call.1}
  #allocation0 [shape = 'u32[]', space=smem, size = 0x4, offset = 0x4, fixed_abs, tag = 'smem constant byte address 0x4 - core index']
  #allocation1 [shape = 'u32[72,128]{1,0:T(1,128)}', space=vmem, size = 0x9000, scoped, tag = 'internal scratch']
  %s0 = inlined_call_operand.hbm [shape: f32[2,4,16,16], index: 0, kind: input, shape index: {}]
  %s1 = inlined_call_operand.hbm [shape: f32[2,2,256], index: 1, kind: input, shape index: {}]
  %s2 = inlined_call_operand.hbm [shape: f32[2,4,256], index: 2, kind: output, shape index: {}]
  %s3 = sld [smem:[#allocation0]]
  $region49: #{tpu_custom_call.1} parent=0
    _
  %s5 = ssub.s32 1, %s3
  %s6 = scalar_select 0, %s5, %s3
  $region1: #{tpu_custom_call.1} parent=0
    #allocation2 [shape = 'u8[65536]{0}', space=vmem, size = 0x10000, scoped, tag = 'input window, operand 0']
    #allocation3 [shape = 's32[2]{0}', space=sflag, size = 0x8, scoped, tag = 'scoped memory for tpu_custom_call.1']
    #allocation4 [shape = 's32[2]{0}', space=sflag, size = 0x8, scoped, tag = 'scoped memory for tpu_custom_call.1']
    #allocation5 [shape = 'u8[4096]{0}', space=vmem, size = 0x1000, scoped, tag = 'input window, operand 1']
    #allocation6 [shape = 's32[2]{0}', space=sflag, size = 0x8, scoped, tag = 'scoped memory for tpu_custom_call.1']
    #allocation7 [shape = 'u8[8192]{0}', space=vmem, size = 0x2000, scoped, tag = 'output window, operand 0']
    %7 = vsyncpa [#allocation3], 0
    %s8 = scalar_lea.sflag [#allocation3], 1
    %9 = vsyncpa %s8, 0
    %10 = vsyncpa [#allocation6], 0
    %s11 = scalar_lea.sflag [#allocation6], 1
    %12 = vsyncpa %s11, 0
    %13 = vsyncpa [#allocation4], 0
    %s14 = scalar_lea.sflag [#allocation4], 1
    %15 = vsyncpa %s14, 0
    loop: start=0, step=1, limit=4
    $region2: #{tpu_custom_call.1} parent=1 // loop_pre_header
      _
    $region3: #{tpu_custom_call.1} parent=1 // loop_header
      %s17 = sphi 0, %s21
      %p18 = scmp.ge.s32.totalorder %s17, 4
      %s24 = sphi 0, %s36
      %s25 = sphi 0, %s32
      %s26 = sphi 0, %s24
      %s27 = sphi 0, %s25
      %s28 = sphi 0, %s26
      %s29 = sphi 0, %s27
      %s39 = sphi 0, %s41
      %s42 = sphi 0, %s39
      %s43 = sphi 0, %s42
      %s59 = sphi 0, %s43
      %s67 = sphi 0, %s69
      %s70 = sphi 0, %s67
      %s71 = sphi 0, %s70
      %s87 = sphi 0, %s71
      %s95 = sphi 0, %s97
      %s98 = sphi 0, %s95
      %s99 = sphi 0, %s98
      %s115 = sphi 0, %s99
    $region4: #{tpu_custom_call.1} parent=1 // loop_header_branch
      %20 = sbr.rel (%p18) target = $region8
    $region5: #{tpu_custom_call.1} parent=1 // loop_body
      %s22 = ssub.s32 %s17, 1
      %s23 = ssub.s32 %s17, 2
      %s30 = sadd.s32 1, %s25
      %p31 = scmp.ge.s32.totalorder %s30, 1
      %s32 = scalar_select %p31, 0, %s30
      %s33 = sadd.s32 1, %s24
      %s34 = scalar_select %p31, %s33, %s24
      %p35 = scmp.ge.s32.totalorder %s34, 2
      %s36 = scalar_select %p35, 0, %s34
      %s37 = ssub.s32 %s24, %s36
      %p38 = scmp.eq.s32.totalorder %s37, 0
      %s40 = sadd.s32 %s39, 1
      %s41 = scalar_select %p38, %s39, %s40
      %p44 = pneg %p38
      %p45 = scmp.eq.s32.totalorder %s17, 1
      %p46 = por %p44, %p45
      %p47 = scmp.ne.s32.totalorder %s39, %s42
      %p48 = scmp.eq.s32.totalorder %s17, 0
      %p49 = por %p47, %p48
      %p50 = scmp.ne.s32.totalorder %s39, %s42
      %p51 = scmp.eq.s32.totalorder %s22, 1
      %p52 = por %p50, %p51
      %p53 = scmp.ne.s32.totalorder %s42, %s43
      %p54 = scmp.eq.s32.totalorder %s22, 0
      %p55 = por %p53, %p54
      %p56 = scmp.ne.s32.totalorder %s42, %s43
      %p57 = scmp.eq.s32.totalorder %s23, 1
      %p58 = por %p56, %p57
      %p60 = scmp.ne.s32.totalorder %s43, %s59
      %p61 = scmp.eq.s32.totalorder %s23, 0
      %p62 = por %p60, %p61
      %s63 = ssub.s32 %s24, %s36
      %s64 = ssub.s32 %s25, %s32
      %s65 = sor.u32 %s63, %s64
      %p66 = scmp.eq.s32.totalorder %s65, 0
      %s68 = sadd.s32 %s67, 1
      %s69 = scalar_select %p66, %s67, %s68
      %p72 = pneg %p66
      %p73 = scmp.eq.s32.totalorder %s17, 1
      %p74 = por %p72, %p73
      %p75 = scmp.ne.s32.totalorder %s67, %s70
      %p76 = scmp.eq.s32.totalorder %s17, 0
      %p77 = por %p75, %p76
      %p78 = scmp.ne.s32.totalorder %s67, %s70
      %p79 = scmp.eq.s32.totalorder %s22, 1
      %p80 = por %p78, %p79
      %p81 = scmp.ne.s32.totalorder %s70, %s71
      %p82 = scmp.eq.s32.totalorder %s22, 0
      %p83 = por %p81, %p82
      %p84 = scmp.ne.s32.totalorder %s70, %s71
      %p85 = scmp.eq.s32.totalorder %s23, 1
      %p86 = por %p84, %p85
      %p88 = scmp.ne.s32.totalorder %s71, %s87
      %p89 = scmp.eq.s32.totalorder %s23, 0
      %p90 = por %p88, %p89
      %s91 = ssub.s32 %s24, %s36
      %s92 = ssub.s32 %s25, %s32
      %s93 = sor.u32 %s91, %s92
      %p94 = scmp.eq.s32.totalorder %s93, 0
      %s96 = sadd.s32 %s95, 1
      %s97 = scalar_select %p94, %s95, %s96
      %p100 = pneg %p94
      %p101 = scmp.eq.s32.totalorder %s17, 1
      %p102 = por %p100, %p101
      %p103 = scmp.ne.s32.totalorder %s95, %s98
      %p104 = scmp.eq.s32.totalorder %s17, 0
      %p105 = por %p103, %p104
      %p106 = scmp.ne.s32.totalorder %s95, %s98
      %p107 = scmp.eq.s32.totalorder %s22, 1
      %p108 = por %p106, %p107
      %p109 = scmp.ne.s32.totalorder %s98, %s99
      %p110 = scmp.eq.s32.totalorder %s22, 0
      %p111 = por %p109, %p110
      %p112 = scmp.ne.s32.totalorder %s98, %s99
      %p113 = scmp.eq.s32.totalorder %s23, 1
      %p114 = por %p112, %p113
      %p116 = scmp.ne.s32.totalorder %s99, %s115
      %p117 = scmp.eq.s32.totalorder %s23, 0
      %p118 = por %p116, %p117
      %p119 = scmp.le.s32.totalorder 1, %s17
      %p120 = scmp.lt.s32.totalorder %s17, 3
      %p121 = pnand %p119, %p120
      %p122 = pneg %p121
      // Predicated region
      $region9: #{tpu_custom_call.1} parent=5 // pred_check
        _
      $region10: #{tpu_custom_call.1} parent=5 // pred_check_branch
        %124 = sbr.rel (%p121) target = $region12
      $region11: #{tpu_custom_call.1} parent=5 // pred_region
        %s125 = ssub.s32 %s17, 1
      $region12: #{tpu_custom_call.1} parent=5 // pred_fallthru
        _
      %p126 = scmp.lt.s32.totalorder %s17, 2
      // Predicated region
      $region13: #{tpu_custom_call.1} parent=5 // pred_check
        %p127 = pneg %p126
      $region14: #{tpu_custom_call.1} parent=5 // pred_check_branch
        %129 = sbr.rel (%p127) target = $region16
      $region15: #{tpu_custom_call.1} parent=5 // pred_region
        // Predicated region
        $region17: #{tpu_custom_call.1} parent=15 // pred_check
          %p130 = pneg %p49
        $region18: #{tpu_custom_call.1} parent=15 // pred_check_branch
          %132 = sbr.rel (%p130) target = $region20
        $region19: #{tpu_custom_call.1} parent=15 // pred_region
          %s133 = sand.u32 %s39, 1
          %s134 = scalar_lea.sflag [#allocation3], %s133
          %s135 = sand.u32 %s39, 1
          %s136 = smul.addr %s135, 64
          %s137 = scalar_lea.vmem [#allocation2], %s136
          %139 = vsyncadd %s134, 0
          %s140 = smul.addr %s24, 8
          %s141 = smul.addr %s140, 8
          %s142 = scalar_lea.hbm %s0, %s141
          %s143 = sshll.u32 %s142, 4
          %s144 = int_to_ptr.hbm [resolvable:$true] %s143
          %s145 = sshll.u32 %s137, 4
          %s146 = int_to_ptr.vmem [resolvable:$true] %s145
          %151 = dma.hbm_to_vmem [thread:$0]  %s144, 1024, %s146, %s134, 128, 128, 8
        $region20: #{tpu_custom_call.1} parent=15 // pred_fallthru
          _
        // Predicated region
        $region21: #{tpu_custom_call.1} parent=15 // pred_check
          %p152 = pneg %p77
        $region22: #{tpu_custom_call.1} parent=15 // pred_check_branch
          %154 = sbr.rel (%p152) target = $region24
        $region23: #{tpu_custom_call.1} parent=15 // pred_region
          %s155 = sand.u32 %s67, 1
          %s156 = scalar_lea.sflag [#allocation6], %s155
          %s157 = sand.u32 %s67, 1
          %s158 = smul.addr %s157, 4
          %s159 = scalar_lea.vmem [#allocation5], %s158
          %s160 = smul.u32 2, %s25
          %162 = vsyncadd %s156, 0
          %s163 = smul.addr %s24, 2
          %s164 = sadd.s32 %s160, %s163
          %s165 = smul.addr %s164, 2
          %s166 = scalar_lea.hbm %s1, %s165
          %s168 = sshll.u32 %s166, 4
          %s169 = int_to_ptr.hbm [resolvable:$true] %s168
          %s170 = sshll.u32 %s159, 4
          %s171 = int_to_ptr.vmem [resolvable:$true] %s170
          %173 = dma.hbm_to_vmem [thread:$0]  %s169, 64, %s171, %s156
        $region24: #{tpu_custom_call.1} parent=15 // pred_fallthru
          _
      $region16: #{tpu_custom_call.1} parent=5 // pred_fallthru
        _
      %p174 = scmp.le.s32.totalorder 1, %s17
      %p175 = scmp.lt.s32.totalorder %s17, 3
      %p176 = pnand %p174, %p175
      %p177 = pneg %p176
      // Predicated region
      $region25: #{tpu_custom_call.1} parent=5 // pred_check
        _
      $region26: #{tpu_custom_call.1} parent=5 // pred_check_branch
        %179 = sbr.rel (%p176) target = $region28
      $region27: #{tpu_custom_call.1} parent=5 // pred_region
        %s180 = ssub.s32 %s17, 1
        %s181 = sand.u32 %s42, 1
        %s182 = scalar_lea.sflag [#allocation3], %s181
        %s183 = sand.u32 %s42, 1
        %s184 = smul.addr %s183, 64
        %s185 = scalar_lea.vmem [#allocation2], %s184
        // Predicated region
        $region29: #{tpu_custom_call.1} parent=27 // pred_check
          %p186 = pneg %p55
        $region30: #{tpu_custom_call.1} parent=27 // pred_check_branch
          %188 = sbr.rel (%p186) target = $region32
        $region31: #{tpu_custom_call.1} parent=27 // pred_region
          %190 = dma.done %s182, 1024
        $region32: #{tpu_custom_call.1} parent=27 // pred_fallthru
          _
        %s191 = sand.u32 %s70, 1
        %s192 = scalar_lea.sflag [#allocation6], %s191
        %s193 = sand.u32 %s70, 1
        %s194 = smul.addr %s193, 4
        %s195 = scalar_lea.vmem [#allocation5], %s194
        // Predicated region
        $region33: #{tpu_custom_call.1} parent=27 // pred_check
          %p196 = pneg %p83
        $region34: #{tpu_custom_call.1} parent=27 // pred_check_branch
          %198 = sbr.rel (%p196) target = $region36
        $region35: #{tpu_custom_call.1} parent=27 // pred_region
          %200 = dma.done %s192, 64
        $region36: #{tpu_custom_call.1} parent=27 // pred_fallthru
          _
        %s201 = sand.u32 %s42, 1
        %s202 = scalar_lea.sflag [#allocation3], %s201
        %s203 = sand.u32 %s42, 1
        %s204 = smul.addr %s203, 64
        %s205 = scalar_lea.vmem [#allocation2], %s204
        %p206 = pneg %p55
        %p207 = pneg %p52
        %s208 = sand.u32 %s70, 1
        %s209 = scalar_lea.sflag [#allocation6], %s208
        %s210 = sand.u32 %s70, 1
        %s211 = smul.addr %s210, 4
        %s212 = scalar_lea.vmem [#allocation5], %s211
        %p213 = pneg %p83
        %p214 = pneg %p80
        %p215 = pneg %p111
        %p216 = pneg %p108
        %s217 = sand.u32 %s98, 1
        %s218 = scalar_lea.sflag [#allocation4], %s217
        %s219 = sand.u32 %s98, 1
        %s220 = smul.addr %s219, 8
        %s221 = scalar_lea.vmem [#allocation7], %s220
        %s222 = smul.u32 2, %s27
        %s223 = smul.u32 2, %s27
        %v224 = vld [vmem:[%s195] ss:$2 sm:$0x3]
        %s225 = scalar_lea.vmem %s195, 1 [#allocation5]
        %v226 = vld [vmem:[%s225] ss:$2 sm:$0x3]
        %v227 = vfloor.f32 %v224
        %v228 = vfloor.f32 %v226
        %v229 = vsub.f32 %v224, %v227
        %v230 = vsub.f32 1.0, %v229
        %v231 = vsub.f32 %v226, %v228
        %v232 = vsub.f32 1.0, %v231
        %vm233 = vcmp.ge.f32.partialorder %v228, 0.0
        %vm234 = vcmp.le.f32.partialorder %v228, 15.0
        %vm235 = vmand %vm233, %vm234
        %v236 = vsel %vm235, %v232, 0.0
        %vm237 = vcmp.ge.f32.partialorder %v228, -1.0
        %vm238 = vcmp.le.f32.partialorder %v228, 14.0
        %vm239 = vmand %vm237, %vm238
        %v240 = vsel %vm239, %v231, 0.0
        %vm241 = vcmp.ge.f32.partialorder %v227, 0.0
        %vm242 = vcmp.le.f32.partialorder %v227, 15.0
        %vm243 = vmand %vm241, %vm242
        %v244 = vsel %vm243, %v230, 0.0
        %vm245 = vcmp.ge.f32.partialorder %v227, -1.0
        %vm246 = vcmp.le.f32.partialorder %v227, 14.0
        %vm247 = vmand %vm245, %vm246
        %v248 = vsel %vm247, %v229, 0.0
        %v249 = vcvt.f32.s32.to.zero.pseudo %v228
        %v250 = vcvt.f32.s32.to.zero.pseudo %v227
        %v251 = vlaneseq
        %v252 = vshrl.u32 %v251, 7
        %v253 = vadd.s32 %v252, 8
        %v254 = vperm.slane %v249, 0
        %v255 = vperm.slane %v249, 1
        %vm256 = vcmp.eq.s32.totalorder %v252, %v254
        %vm257 = vcmp.eq.s32.totalorder %v252, %v255
        %vm258 = vcmp.eq.s32.totalorder %v253, %v254
        %vm259 = vcmp.eq.s32.totalorder %v253, %v255
        %v261 = vperm.slane %v236, 0
        %v262 = vperm.slane %v236, 1
        %v265 = vsel %vm256, %v261, 0.0
        %v266 = vsel %vm257, %v262, 0.0
        %v267 = vsel %vm258, %v261, 0.0
        %v268 = vsel %vm259, %v262, 0.0
        %v269 = vadd.s32 %v249, 1
        %v270 = vperm.slane %v269, 0
        %v271 = vperm.slane %v269, 1
        %vm272 = vcmp.eq.s32.totalorder %v252, %v270
        %vm273 = vcmp.eq.s32.totalorder %v252, %v271
        %vm274 = vcmp.eq.s32.totalorder %v253, %v270
        %vm275 = vcmp.eq.s32.totalorder %v253, %v271
        %v277 = vperm.slane %v240, 0
        %v278 = vperm.slane %v240, 1
        %v281 = vsel %vm272, %v277, %v265
        %v282 = vsel %vm273, %v278, %v266
        %v283 = vsel %vm274, %v277, %v267
        %v284 = vsel %vm275, %v278, %v268
        %v285 = vperm.slane %v250, 0
        %v286 = vperm.slane %v250, 1
        %vm287 = vcmp.eq.s32.totalorder %v252, %v285
        %vm288 = vcmp.eq.s32.totalorder %v252, %v286
        %vm289 = vcmp.eq.s32.totalorder %v253, %v285
        %vm290 = vcmp.eq.s32.totalorder %v253, %v286
        %v292 = vperm.slane %v244, 0
        %v293 = vperm.slane %v244, 1
        %v296 = vsel %vm287, %v292, 0.0
        %v297 = vsel %vm288, %v293, 0.0
        %v298 = vsel %vm289, %v292, 0.0
        %v299 = vsel %vm290, %v293, 0.0
        %v300 = vadd.s32 %v250, 1
        %v301 = vperm.slane %v300, 0
        %v302 = vperm.slane %v300, 1
        %vm303 = vcmp.eq.s32.totalorder %v252, %v301
        %vm304 = vcmp.eq.s32.totalorder %v252, %v302
        %vm305 = vcmp.eq.s32.totalorder %v253, %v301
        %vm306 = vcmp.eq.s32.totalorder %v253, %v302
        %v308 = vperm.slane %v248, 0
        %v309 = vperm.slane %v248, 1
        %v312 = vsel %vm303, %v308, %v296
        %v313 = vsel %vm304, %v309, %v297
        %v314 = vsel %vm305, %v308, %v298
        %v315 = vsel %vm306, %v309, %v299
        %v316 = vld [vmem:[%s185] sm:$0xff]
        %v317 = vld [vmem:[%s185 + $0x8] sm:$0xff]
        %vm318 = vcmask 130048
        %v320 = vsel %vm318, %v316, 0
        %v323 = vsel %vm318, %v317, 0
        %325 = vmatpush.msra.mxu0 0.0
        %326 = vmatpush.msra.mxu0 0.0
        %327 = vmatpush.msra.mxu0 0.0
        %328 = vmatpush.msra.mxu0 0.0
        %329 = vmatpush.msra.mxu0 0.0
        %330 = vmatpush.msra.mxu0 0.0
        %331 = vmatpush.msra.mxu0 0.0
        %332 = vmatpush.msra.mxu0 0.0
        %333 = vmatpush.msra.mxu0 0.0
        %334 = vmatpush.msra.mxu0 0.0
        %335 = vmatpush.msra.mxu0 0.0
        %336 = vmatpush.msra.mxu0 0.0
        %337 = vmatpush.msra.mxu0 0.0
        %338 = vmatpush.msra.mxu0 0.0
        %339 = vmatpush.msra.mxu0 %v283
        %340 = vmatpush.msra.mxu0 %v281
        %341 = vmatmul.f32.gmra.mxu0 %v320
        %v342 = vpop.f32.mrf.mxu0
        %v343 = vadd.f32 0.0, %v342
        %344 = vmatmul.f32.gmra.mxu0 %v323
        %v345 = vpop.f32.mrf.mxu0
        %v346 = vadd.f32 0.0, %v345
        %347 = vdwg.mxu0
        %348 = vmatpush.msra.mxu0 0.0
        %349 = vmatpush.msra.mxu0 0.0
        %350 = vmatpush.msra.mxu0 0.0
        %351 = vmatpush.msra.mxu0 0.0
        %352 = vmatpush.msra.mxu0 0.0
        %353 = vmatpush.msra.mxu0 0.0
        %354 = vmatpush.msra.mxu0 0.0
        %355 = vmatpush.msra.mxu0 0.0
        %356 = vmatpush.msra.mxu0 0.0
        %357 = vmatpush.msra.mxu0 0.0
        %358 = vmatpush.msra.mxu0 0.0
        %359 = vmatpush.msra.mxu0 0.0
        %360 = vmatpush.msra.mxu0 0.0
        %361 = vmatpush.msra.mxu0 0.0
        %362 = vmatpush.msra.mxu0 %v284
        %363 = vmatpush.msra.mxu0 %v282
        %364 = vmatmul.f32.gmra.mxu0 %v320
        %v365 = vpop.f32.mrf.mxu0
        %v366 = vadd.f32 0.0, %v365
        %367 = vmatmul.f32.gmra.mxu0 %v323
        %v368 = vpop.f32.mrf.mxu0
        %v369 = vadd.f32 0.0, %v368
        %370 = vdwg.mxu0
        %v371 = vmul.f32 %v343, %v312
        %v372 = vmul.f32 %v366, %v313
        %v373 = vmul.f32 %v346, %v314
        %v374 = vmul.f32 %v369, %v315
        %v375 = vadd.f32 %v371, %v373
        %v376 = vrot.slane %v375, 4
        %v377 = vadd.f32 %v375, %v376
        %v378 = vrot.slane %v377, 2
        %v379 = vadd.f32 %v377, %v378
        %v380 = vrot.slane %v379, 1
        %v381 = vadd.f32 %v379, %v380
        %v382 = vadd.f32 %v372, %v374
        %v383 = vrot.slane %v382, 4
        %v384 = vadd.f32 %v382, %v383
        %v385 = vrot.slane %v384, 2
        %v386 = vadd.f32 %v384, %v385
        %v387 = vrot.slane %v386, 1
        %v388 = vadd.f32 %v386, %v387
        %s389 = scalar_lea.vmem %s185, 16 [#allocation2]
        %v390 = vld [vmem:[%s389] sm:$0xff]
        %v391 = vld [vmem:[%s389 + $0x8] sm:$0xff]
        %v393 = vsel %vm318, %v390, 0
        %v396 = vsel %vm318, %v391, 0
        %398 = vmatpush.msra.mxu0 0.0
        %399 = vmatpush.msra.mxu0 0.0
        %400 = vmatpush.msra.mxu0 0.0
        %401 = vmatpush.msra.mxu0 0.0
        %402 = vmatpush.msra.mxu0 0.0
        %403 = vmatpush.msra.mxu0 0.0
        %404 = vmatpush.msra.mxu0 0.0
        %405 = vmatpush.msra.mxu0 0.0
        %406 = vmatpush.msra.mxu0 0.0
        %407 = vmatpush.msra.mxu0 0.0
        %408 = vmatpush.msra.mxu0 0.0
        %409 = vmatpush.msra.mxu0 0.0
        %410 = vmatpush.msra.mxu0 0.0
        %411 = vmatpush.msra.mxu0 0.0
        %412 = vmatpush.msra.mxu0 %v283
        %413 = vmatpush.msra.mxu0 %v281
        %414 = vmatmul.f32.gmra.mxu0 %v393
        %v415 = vpop.f32.mrf.mxu0
        %v416 = vadd.f32 0.0, %v415
        %417 = vmatmul.f32.gmra.mxu0 %v396
        %v418 = vpop.f32.mrf.mxu0
        %v419 = vadd.f32 0.0, %v418
        %420 = vdwg.mxu0
        %421 = vmatpush.msra.mxu0 0.0
        %422 = vmatpush.msra.mxu0 0.0
        %423 = vmatpush.msra.mxu0 0.0
        %424 = vmatpush.msra.mxu0 0.0
        %425 = vmatpush.msra.mxu0 0.0
        %426 = vmatpush.msra.mxu0 0.0
        %427 = vmatpush.msra.mxu0 0.0
        %428 = vmatpush.msra.mxu0 0.0
        %429 = vmatpush.msra.mxu0 0.0
        %430 = vmatpush.msra.mxu0 0.0
        %431 = vmatpush.msra.mxu0 0.0
        %432 = vmatpush.msra.mxu0 0.0
        %433 = vmatpush.msra.mxu0 0.0
        %434 = vmatpush.msra.mxu0 0.0
        %435 = vmatpush.msra.mxu0 %v284
        %436 = vmatpush.msra.mxu0 %v282
        %437 = vmatmul.f32.gmra.mxu0 %v393
        %v438 = vpop.f32.mrf.mxu0
        %v439 = vadd.f32 0.0, %v438
        %440 = vmatmul.f32.gmra.mxu0 %v396
        %v441 = vpop.f32.mrf.mxu0
        %v442 = vadd.f32 0.0, %v441
        %443 = vdwg.mxu0
        %v444 = vmul.f32 %v416, %v312
        %v445 = vmul.f32 %v439, %v313
        %v446 = vmul.f32 %v419, %v314
        %v447 = vmul.f32 %v442, %v315
        %v448 = vadd.f32 %v444, %v446
        %v449 = vrot.slane %v448, 4
        %v450 = vadd.f32 %v448, %v449
        %v451 = vrot.slane %v450, 2
        %v452 = vadd.f32 %v450, %v451
        %v453 = vrot.slane %v452, 1
        %v454 = vadd.f32 %v452, %v453
        %v455 = vadd.f32 %v445, %v447
        %v456 = vrot.slane %v455, 4
        %v457 = vadd.f32 %v455, %v456
        %v458 = vrot.slane %v457, 2
        %v459 = vadd.f32 %v457, %v458
        %v460 = vrot.slane %v459, 1
        %v461 = vadd.f32 %v459, %v460
        %s462 = scalar_lea.vmem %s185, 32 [#allocation2]
        %v463 = vld [vmem:[%s462] sm:$0xff]
        %v464 = vld [vmem:[%s462 + $0x8] sm:$0xff]
        %v466 = vsel %vm318, %v463, 0
        %v469 = vsel %vm318, %v464, 0
        %471 = vmatpush.msra.mxu0 0.0
        %472 = vmatpush.msra.mxu0 0.0
        %473 = vmatpush.msra.mxu0 0.0
        %474 = vmatpush.msra.mxu0 0.0
        %475 = vmatpush.msra.mxu0 0.0
        %476 = vmatpush.msra.mxu0 0.0
        %477 = vmatpush.msra.mxu0 0.0
        %478 = vmatpush.msra.mxu0 0.0
        %479 = vmatpush.msra.mxu0 0.0
        %480 = vmatpush.msra.mxu0 0.0
        %481 = vmatpush.msra.mxu0 0.0
        %482 = vmatpush.msra.mxu0 0.0
        %483 = vmatpush.msra.mxu0 0.0
        %484 = vmatpush.msra.mxu0 0.0
        %485 = vmatpush.msra.mxu0 %v283
        %486 = vmatpush.msra.mxu0 %v281
        %487 = vmatmul.f32.gmra.mxu0 %v466
        %v488 = vpop.f32.mrf.mxu0
        %v489 = vadd.f32 0.0, %v488
        %490 = vmatmul.f32.gmra.mxu0 %v469
        %v491 = vpop.f32.mrf.mxu0
        %v492 = vadd.f32 0.0, %v491
        %493 = vdwg.mxu0
        %494 = vmatpush.msra.mxu0 0.0
        %495 = vmatpush.msra.mxu0 0.0
        %496 = vmatpush.msra.mxu0 0.0
        %497 = vmatpush.msra.mxu0 0.0
        %498 = vmatpush.msra.mxu0 0.0
        %499 = vmatpush.msra.mxu0 0.0
        %500 = vmatpush.msra.mxu0 0.0
        %501 = vmatpush.msra.mxu0 0.0
        %502 = vmatpush.msra.mxu0 0.0
        %503 = vmatpush.msra.mxu0 0.0
        %504 = vmatpush.msra.mxu0 0.0
        %505 = vmatpush.msra.mxu0 0.0
        %506 = vmatpush.msra.mxu0 0.0
        %507 = vmatpush.msra.mxu0 0.0
        %508 = vmatpush.msra.mxu0 %v284
        %509 = vmatpush.msra.mxu0 %v282
        %510 = vmatmul.f32.gmra.mxu0 %v466
        %v511 = vpop.f32.mrf.mxu0
        %v512 = vadd.f32 0.0, %v511
        %513 = vmatmul.f32.gmra.mxu0 %v469
        %v514 = vpop.f32.mrf.mxu0
        %v515 = vadd.f32 0.0, %v514
        %516 = vdwg.mxu0
        %v517 = vmul.f32 %v489, %v312
        %v518 = vmul.f32 %v512, %v313
        %v519 = vmul.f32 %v492, %v314
        %v520 = vmul.f32 %v515, %v315
        %v521 = vadd.f32 %v517, %v519
        %v522 = vrot.slane %v521, 4
        %v523 = vadd.f32 %v521, %v522
        %v524 = vrot.slane %v523, 2
        %v525 = vadd.f32 %v523, %v524
        %v526 = vrot.slane %v525, 1
        %v527 = vadd.f32 %v525, %v526
        %v528 = vadd.f32 %v518, %v520
        %v529 = vrot.slane %v528, 4
        %v530 = vadd.f32 %v528, %v529
        %v531 = vrot.slane %v530, 2
        %v532 = vadd.f32 %v530, %v531
        %v533 = vrot.slane %v532, 1
        %v534 = vadd.f32 %v532, %v533
        %s535 = scalar_lea.vmem %s185, 48 [#allocation2]
        %v536 = vld [vmem:[%s535] sm:$0xff]
        %v537 = vld [vmem:[%s535 + $0x8] sm:$0xff]
        %v539 = vsel %vm318, %v536, 0
        %v542 = vsel %vm318, %v537, 0
        %544 = vmatpush.msra.mxu0 0.0
        %545 = vmatpush.msra.mxu0 0.0
        %546 = vmatpush.msra.mxu0 0.0
        %547 = vmatpush.msra.mxu0 0.0
        %548 = vmatpush.msra.mxu0 0.0
        %549 = vmatpush.msra.mxu0 0.0
        %550 = vmatpush.msra.mxu0 0.0
        %551 = vmatpush.msra.mxu0 0.0
        %552 = vmatpush.msra.mxu0 0.0
        %553 = vmatpush.msra.mxu0 0.0
        %554 = vmatpush.msra.mxu0 0.0
        %555 = vmatpush.msra.mxu0 0.0
        %556 = vmatpush.msra.mxu0 0.0
        %557 = vmatpush.msra.mxu0 0.0
        %558 = vmatpush.msra.mxu0 %v283
        %559 = vmatpush.msra.mxu0 %v281
        %560 = vmatmul.f32.gmra.mxu0 %v539
        %v561 = vpop.f32.mrf.mxu0
        %v562 = vadd.f32 0.0, %v561
        %563 = vmatmul.f32.gmra.mxu0 %v542
        %v564 = vpop.f32.mrf.mxu0
        %v565 = vadd.f32 0.0, %v564
        %566 = vdwg.mxu0
        %567 = vmatpush.msra.mxu0 0.0
        %568 = vmatpush.msra.mxu0 0.0
        %569 = vmatpush.msra.mxu0 0.0
        %570 = vmatpush.msra.mxu0 0.0
        %571 = vmatpush.msra.mxu0 0.0
        %572 = vmatpush.msra.mxu0 0.0
        %573 = vmatpush.msra.mxu0 0.0
        %574 = vmatpush.msra.mxu0 0.0
        %575 = vmatpush.msra.mxu0 0.0
        %576 = vmatpush.msra.mxu0 0.0
        %577 = vmatpush.msra.mxu0 0.0
        %578 = vmatpush.msra.mxu0 0.0
        %579 = vmatpush.msra.mxu0 0.0
        %580 = vmatpush.msra.mxu0 0.0
        %581 = vmatpush.msra.mxu0 %v284
        %582 = vmatpush.msra.mxu0 %v282
        %583 = vmatmul.f32.gmra.mxu0 %v539
        %v584 = vpop.f32.mrf.mxu0
        %v585 = vadd.f32 0.0, %v584
        %586 = vmatmul.f32.gmra.mxu0 %v542
        %v587 = vpop.f32.mrf.mxu0
        %v588 = vadd.f32 0.0, %v587
        %589 = vdwg.mxu0
        %v590 = vmul.f32 %v562, %v312
        %v591 = vmul.f32 %v585, %v313
        %v592 = vmul.f32 %v565, %v314
        %v593 = vmul.f32 %v588, %v315
        %v594 = vadd.f32 %v590, %v592
        %v595 = vrot.slane %v594, 4
        %v596 = vadd.f32 %v594, %v595
        %v597 = vrot.slane %v596, 2
        %v598 = vadd.f32 %v596, %v597
        %v599 = vrot.slane %v598, 1
        %v600 = vadd.f32 %v598, %v599
        %v601 = vadd.f32 %v591, %v593
        %v602 = vrot.slane %v601, 4
        %v603 = vadd.f32 %v601, %v602
        %v604 = vrot.slane %v603, 2
        %v605 = vadd.f32 %v603, %v604
        %v606 = vrot.slane %v605, 1
        %v607 = vadd.f32 %v605, %v606
        %vm608 = vcmask 1040384
        %v609 = vsel %vm608, %v381, %v454
        %v610 = vsel %vm608, %v388, %v461
        %vm611 = vcmask 1041408
        %v612 = vsel %vm611, %v609, %v527
        %v613 = vsel %vm611, %v610, %v534
        %vm614 = vcmask 1042432
        %v615 = vsel %vm614, %v612, %v600
        %v616 = vsel %vm614, %v613, %v607
        %v619 = vrot.slane %v616, 4
        %vm620 = vcmask 1043456
        %v621 = vsel %vm620, %v615, %v619
        %623 = vst [vmem:[%s221] sm:$0xff] %v621
        %s624 = sand.u32 %s98, 1
        %s625 = scalar_lea.sflag [#allocation4], %s624
        %s626 = sand.u32 %s98, 1
        %s627 = smul.addr %s626, 8
        %s628 = scalar_lea.vmem [#allocation7], %s627
        // Predicated region
        $region37: #{tpu_custom_call.1} parent=27 // pred_check
          %p629 = pneg %p108
        $region38: #{tpu_custom_call.1} parent=27 // pred_check_branch
          %631 = sbr.rel (%p629) target = $region40
        $region39: #{tpu_custom_call.1} parent=27 // pred_region
          %s632 = smul.u32 2, %s27
          %634 = vsyncadd %s625, 0
          %s635 = smul.addr %s26, 2
          %s636 = sadd.s32 %s632, %s635
          %s637 = smul.addr %s636, 4
          %s638 = scalar_lea.hbm %s2, %s637
          %s640 = sshll.u32 %s628, 4
          %s641 = int_to_ptr.vmem [resolvable:$true] %s640
          %s642 = sshll.u32 %s638, 4
          %s643 = int_to_ptr.hbm [resolvable:$true] %s642
          %645 = dma.vmem_to_hbm [thread:$0]  %s641, 128, %s643, %s625
        $region40: #{tpu_custom_call.1} parent=27 // pred_fallthru
          _
      $region28: #{tpu_custom_call.1} parent=5 // pred_fallthru
        _
      %p646 = scmp.le.s32.totalorder 2, %s17
      // Predicated region
      $region41: #{tpu_custom_call.1} parent=5 // pred_check
        %p647 = pneg %p646
      $region42: #{tpu_custom_call.1} parent=5 // pred_check_branch
        %649 = sbr.rel (%p647) target = $region44
      $region43: #{tpu_custom_call.1} parent=5 // pred_region
        %s650 = ssub.s32 %s17, 2
        // Predicated region
        $region45: #{tpu_custom_call.1} parent=43 // pred_check
          %p651 = pneg %p114
        $region46: #{tpu_custom_call.1} parent=43 // pred_check_branch
          %653 = sbr.rel (%p651) target = $region48
        $region47: #{tpu_custom_call.1} parent=43 // pred_region
          %s654 = sand.u32 %s99, 1
          %s655 = scalar_lea.sflag [#allocation4], %s654
          %s656 = sand.u32 %s99, 1
          %s657 = smul.addr %s656, 8
          %s658 = scalar_lea.vmem [#allocation7], %s657
          %660 = dma.done %s655, 128
        $region48: #{tpu_custom_call.1} parent=43 // pred_fallthru
          _
      $region44: #{tpu_custom_call.1} parent=5 // pred_fallthru
        _
    $region6: #{tpu_custom_call.1} parent=1 // loop_footer
      %s21 = sadd.s32 1, %s17
    $region7: #{tpu_custom_call.1} parent=1 // loop_footer_branch
      %16 = sbr.rel target = $region3
    $region8: #{tpu_custom_call.1} parent=1 // loop_exit
      _
    %661 = vsyncpa [#allocation3], 1
    %s662 = scalar_lea.sflag [#allocation3], 1
    %663 = vsyncpa %s662, 1
    %664 = vsyncpa [#allocation6], 1
    %s665 = scalar_lea.sflag [#allocation6], 1
    %666 = vsyncpa %s665, 1
    %667 = vsyncpa [#allocation4], 1
    %s668 = scalar_lea.sflag [#allocation4], 1
    %669 = vsyncpa %s668, 1

</llo_original>
